<compile_context>
chip_gen: v7x
topology: tpu7x:2x2x1
jax: 0.10.0
libtpu: 0.0.40
codegen_flags: <defaults>
</compile_context>

<pallas_src>
import jax
import jax.numpy as jnp
from jax.experimental import pallas as pl
from jax.experimental.pallas import tpu as pltpu


def _round_up(x: int, m: int) -> int:
    return (x + m - 1) // m * m


# Max lane-tile for the flattened spatial axis.  2048 keeps 2 double-buffered
# (C, TP) blocks small (C=150, f32: ~1.2 MiB/buf) -> fits the default scoped
# VMEM on v5e (16 MiB) / v6e / v7x (32 MiB) with plenty of headroom, and is
# large enough to amortize the ~0.35 us per-grid-step overhead.
_TP_MAX = 2048


def per_image_ce_loss(output_nchw, label_nhw):
    """F.cross_entropy(output, label, reduction='none').mean((1, 2)) on TPU."""
    n, c, h, w = output_nchw.shape
    p = h * w

    # Tile size: multiple of 128 lanes, capped at _TP_MAX.
    tp = min(_TP_MAX, _round_up(p, 128))
    p_pad = _round_up(p, tp)
    n_p_steps = p_pad // tp

    # Stream logits in their native dtype (no wrapper upcast: the kernel is
    # HBM-bandwidth bound, f32-upcasting here would double DMA bytes).
    logits = output_nchw.reshape(n, c, p)                    # (N, C, P)  native dtype
    labels = label_nhw.reshape(n, 1, p).astype(jnp.int32)    # (N, 1, P)
    if p_pad != p:
        logits = jnp.pad(logits, ((0, 0), (0, 0), (0, p_pad - p)))
        labels = jnp.pad(labels, ((0, 0), (0, 0), (0, p_pad - p)))

    def _ce_image_loss_kernel(logits_ref, labels_ref, out_ref, acc_ref):
        # logits_ref: (C, TP) native dtype, labels_ref: (1, TP) i32,
        # out_ref: (1, 1) f32, acc_ref: (1, 1) f32 scratch (persists over P steps)
        pj = pl.program_id(1)

        @pl.when(pj == 0)
        def _():
            acc_ref[...] = jnp.zeros_like(acc_ref)

        x = logits_ref[...].astype(jnp.float32)                           # (C, TP)
        lab = labels_ref[...]                                             # (1, TP)

        # Mask off padded pixels (global pixel index >= true P).
        lane = jax.lax.broadcasted_iota(jnp.int32, (1, tp), 1) + pj * tp
        valid = lane < p

        # Numerically stable logsumexp over classes (sublane axis 0), with the
        # label-logit select fused into the same sweep over the live tile.
        m = jnp.max(x, axis=0, keepdims=True)                             # (1, TP)
        e = jnp.exp(x - m)                                                # EUP, overlaps VALU/DMA
        class_ids = jax.lax.broadcasted_iota(jnp.int32, x.shape, 0)       # (C, TP)
        sel = jnp.sum(jnp.where(class_ids == lab, x, 0.0),
                      axis=0, keepdims=True)                              # (1, TP)
        lse = m + jnp.log(jnp.sum(e, axis=0, keepdims=True))              # (1, TP)

        # TODO(synk): no ignore_index handling (PyTorch default -100); labels are
        # assumed to lie in [0, C).
        ce = jnp.where(valid, lse - sel, 0.0)                             # (1, TP)
        acc_ref[...] += jnp.sum(ce, axis=1, keepdims=True)

        @pl.when(pj == pl.num_programs(1) - 1)
        def _():
            out_ref[...] = acc_ref[...] / jnp.float32(p)

    out = pl.pallas_call(
        _ce_image_loss_kernel,
        out_shape=jax.ShapeDtypeStruct((n, 1, 1), jnp.float32),
        grid_spec=pltpu.PrefetchScalarGridSpec(
            num_scalar_prefetch=0,
            grid=(n, n_p_steps),
            in_specs=[
                pl.BlockSpec((None, c, tp), lambda b, j: (b, 0, j)),
                pl.BlockSpec((None, 1, tp), lambda b, j: (b, 0, j)),
            ],
            out_specs=pl.BlockSpec((None, 1, 1), lambda b, j: (b, 0, 0)),
            scratch_shapes=[pltpu.VMEM((1, 1), jnp.float32)],
        ),
        compiler_params=pltpu.CompilerParams(
            # N shards across TensorCores (v7x megacore); P is the per-image
            # reduction axis, kept core-local and last.
            dimension_semantics=("parallel", "arbitrary")),
    )(logits, labels)
    return out.reshape(n)


class TrimLossWithRatio:
    """JAX/Pallas port of the PyTorch TrimLossWithRatio module."""

    def __init__(self, num_examp: int, img_size: int = 224, ratio: float = 0.0):
        self.img_size = img_size
        self.ratio = 1 - 1280 / 2211 if ratio < 0 else ratio

    def __call__(self, output, label, index=None):
        # hot path (per-pixel CE + spatial mean) in the Pallas kernel
        image_loss = per_image_ce_loss(output, label)
        image_loss = jax.lax.stop_gradient(image_loss)        # .detach()
        # quantile (sort + linear interpolation) over N scalars: JAX glue.
        thre = jnp.quantile(image_loss, self.ratio)            # torch default 'linear'
        mask = (image_loss > thre).astype(jnp.float32)
        loss = jnp.sum(image_loss * mask) / jnp.sum(mask)
        return loss, jnp.sum(mask)


def _reference_forward(output, label, ratio):
    """Pure-JAX reference matching the PyTorch semantics exactly."""
    logp = jax.nn.log_softmax(output.astype(jnp.float32), axis=1)        # (N,C,H,W)
    ce = -jnp.take_along_axis(logp, label[:, None, :, :], axis=1)[:, 0]  # (N,H,W)
    image_loss = ce.mean(axis=(1, 2))
    thre = jnp.quantile(image_loss, ratio)
    mask = (image_loss > thre).astype(jnp.float32)
    loss = jnp.sum(image_loss * mask) / jnp.sum(mask)
    return loss, jnp.sum(mask)


if __name__ == "__main__":
    # small shapes consistent with the forward: logits (N, C, H, W), labels (N, H, W)
    N, C, H, W = 8, 4, 16, 16
    key = jax.random.PRNGKey(0)
    k_out, k_lab = jax.random.split(key)
    output = jax.random.normal(k_out, (N, C, H, W), dtype=jnp.float32)
    label = jax.random.randint(k_lab, (N, H, W), 0, C, dtype=jnp.int32)
    index = jnp.arange(N, dtype=jnp.int32)  # unused by forward, kept for API parity

    module = TrimLossWithRatio(num_examp=N, img_size=H, ratio=0.0)
    loss, n_kept = module(output, label, index)
    jax.block_until_ready((loss, n_kept))

    ref_loss, ref_n_kept = _reference_forward(output, label, module.ratio)
    assert jnp.allclose(loss, ref_loss, atol=1e-5, rtol=1e-5), (loss, ref_loss)
    assert jnp.allclose(n_kept, ref_n_kept), (n_kept, ref_n_kept)

    print("KERNEL_OK")
</pallas_src>

<mosaic_0001>
module attributes {stable_mosaic.version = 11 : i64} {
  func.func @_ce_image_loss_kernel(%arg0: i32, %arg1: i32, %arg2: memref<1x4x256xf32, #tpu.memory_space<vmem>>, %arg3: memref<1x1x256xi32, #tpu.memory_space<vmem>>, %arg4: memref<1x1x1xf32, #tpu.memory_space<vmem>>, %arg5: memref<1x1xf32, #tpu.memory_space<vmem>>) attributes {dimension_semantics = [#tpu.dimension_semantics<parallel>, #tpu.dimension_semantics<arbitrary>], iteration_bounds = array<i64: 8, 1>, scalar_prefetch = 0 : i64, scratch_operands = 1 : i64, tpu.core_type = #tpu.core_type<tc>, window_params = [{transform_indices = @transform_0, window_bounds = array<i64: 1, 4, 256>}, {transform_indices = @transform_1, window_bounds = array<i64: 1, 1, 256>}, {transform_indices = @transform_2, window_bounds = array<i64: 1, 1, 1>}]} {
    %c0_i32 = arith.constant 0 : i32
    %0 = arith.cmpi eq, %arg1, %c0_i32 : i32
    %1 = arith.extui %0 : i1 to i32
    %c0_i32_0 = arith.constant 0 : i32
    %2 = arith.cmpi ne, %1, %c0_i32_0 : i32
    scf.if %2 {
      %cst_18 = arith.constant 0.000000e+00 : f32
      %40 = vector.broadcast %cst_18 : f32 to vector<1x1xf32>
      %c0_19 = arith.constant 0 : index
      %c0_20 = arith.constant 0 : index
      %41 = vector.load %arg5[%c0_19, %c0_20] : memref<1x1xf32, #tpu.memory_space<vmem>>, vector<1x1xf32>
      tpu.vector_store %arg5[%c0_19, %c0_20], %40 {strides = array<i32>} : memref<1x1xf32, #tpu.memory_space<vmem>>, vector<1x1xf32>,
    } else {
    }
    %c0 = arith.constant 0 : index
    %c0_1 = arith.constant 0 : index
    %c0_2 = arith.constant 0 : index
    %3 = vector.load %arg2[%c0, %c0_1, %c0_2] : memref<1x4x256xf32, #tpu.memory_space<vmem>>, vector<1x4x256xf32>
    %4 = vector.shape_cast %3 : vector<1x4x256xf32> to vector<4x256xf32>
    %c0_3 = arith.constant 0 : index
    %c0_4 = arith.constant 0 : index
    %c0_5 = arith.constant 0 : index
    %5 = vector.load %arg3[%c0_3, %c0_4, %c0_5] : memref<1x1x256xi32, #tpu.memory_space<vmem>>, vector<1x1x256xi32>
    %6 = vector.shape_cast %5 : vector<1x1x256xi32> to vector<1x256xi32>
    %7 = tpu.iota {dimensions = array<i32: 1>} : vector<1x256xi32>
    %c256_i32 = arith.constant 256 : i32
    %8 = arith.muli %arg1, %c256_i32 : i32
    %9 = vector.broadcast %8 : i32 to vector<1x256xi32>
    %10 = arith.addi %7, %9 : vector<1x256xi32>
    %c256_i32_6 = arith.constant 256 : i32
    %11 = vector.broadcast %c256_i32_6 : i32 to vector<1x256xi32>
    %12 = arith.cmpi slt, %10, %11 : vector<1x256xi32>
    %cst = arith.constant dense<0xFF800000> : vector<256xf32>
    %13 = vector.multi_reduction <maximumf>, %4, %cst [0] : vector<4x256xf32> to vector<256xf32>
    %14 = vector.shape_cast %13 : vector<256xf32> to vector<1x256xf32>
    %15 = vector.broadcast %14 : vector<1x256xf32> to vector<4x256xf32>
    %16 = arith.subf %4, %15 : vector<4x256xf32>
    %17 = math.exp %16 : vector<4x256xf32>
    %18 = tpu.iota {dimensions = array<i32: 0>} : vector<4x256xi32>
    %19 = vector.broadcast %6 : vector<1x256xi32> to vector<4x256xi32>
    %20 = arith.cmpi eq, %18, %19 : vector<4x256xi32>
    %cst_7 = arith.constant 0.000000e+00 : f32
    %21 = vector.broadcast %cst_7 : f32 to vector<4x256xf32>
    %22 = arith.select %20, %4, %21 : vector<4x256xi1>, vector<4x256xf32>
    %cst_8 = arith.constant dense<0.000000e+00> : vector<256xf32>
    %23 = vector.multi_reduction <add>, %22, %cst_8 [0] : vector<4x256xf32> to vector<256xf32>
    %24 = vector.shape_cast %23 : vector<256xf32> to vector<1x256xf32>
    %cst_9 = arith.constant dense<0.000000e+00> : vector<256xf32>
    %25 = vector.multi_reduction <add>, %17, %cst_9 [0] : vector<4x256xf32> to vector<256xf32>
    %26 = vector.shape_cast %25 : vector<256xf32> to vector<1x256xf32>
    %27 = math.log %26 : vector<1x256xf32>
    %28 = arith.addf %14, %27 : vector<1x256xf32>
    %29 = arith.subf %28, %24 : vector<1x256xf32>
    %cst_10 = arith.constant 0.000000e+00 : f32
    %30 = vector.broadcast %cst_10 : f32 to vector<1x256xf32>
    %31 = arith.select %12, %29, %30 : vector<1x256xi1>, vector<1x256xf32>
    %c0_11 = arith.constant 0 : index
    %c0_12 = arith.constant 0 : index
    %32 = vector.load %arg5[%c0_11, %c0_12] : memref<1x1xf32, #tpu.memory_space<vmem>>, vector<1x1xf32>
    %cst_13 = arith.constant dense<0.000000e+00> : vector<1xf32>
    %33 = vector.multi_reduction <add>, %31, %cst_13 [1] : vector<1x256xf32> to vector<1xf32>
    %34 = vector.shape_cast %33 : vector<1xf32> to vector<1x1xf32>
    %35 = arith.addf %32, %34 : vector<1x1xf32>
    %c0_14 = arith.constant 0 : index
    %c0_15 = arith.constant 0 : index
    %36 = vector.load %arg5[%c0_14, %c0_15] : memref<1x1xf32, #tpu.memory_space<vmem>>, vector<1x1xf32>
    tpu.vector_store %arg5[%c0_14, %c0_15], %35 {strides = array<i32>} : memref<1x1xf32, #tpu.memory_space<vmem>>, vector<1x1xf32>,
    %c0_i32_16 = arith.constant 0 : i32
    %37 = arith.cmpi eq, %arg1, %c0_i32_16 : i32
    %38 = arith.extui %37 : i1 to i32
    %c0_i32_17 = arith.constant 0 : i32
    %39 = arith.cmpi ne, %38, %c0_i32_17 : i32
    scf.if %39 {
      %c0_18 = arith.constant 0 : index
      %c0_19 = arith.constant 0 : index
      %40 = vector.load %arg5[%c0_18, %c0_19] : memref<1x1xf32, #tpu.memory_space<vmem>>, vector<1x1xf32>
      %cst_20 = arith.constant 2.560000e+02 : f32
      %41 = vector.broadcast %cst_20 : f32 to vector<1x1xf32>
      %42 = arith.divf %40, %41 : vector<1x1xf32>
      %c0_21 = arith.constant 0 : index
      %c0_22 = arith.constant 0 : index
      %c0_23 = arith.constant 0 : index
      %43 = vector.load %arg4[%c0_21, %c0_22, %c0_23] : memref<1x1x1xf32, #tpu.memory_space<vmem>>, vector<1x1x1xf32>
      %44 = vector.shape_cast %43 : vector<1x1x1xf32> to vector<1x1xf32>
      %45 = vector.shape_cast %42 : vector<1x1xf32> to vector<1x1x1xf32>
      tpu.vector_store %arg4[%c0_21, %c0_22, %c0_23], %45 {strides = array<i32>} : memref<1x1x1xf32, #tpu.memory_space<vmem>>, vector<1x1x1xf32>,
    } else {
    }
    return
  }
  func.func @transform_0(%arg0: i32, %arg1: i32) -> (i32, i32, i32) {
    %c0_i32 = arith.constant 0 : i32
    %c0_i32_0 = arith.constant 0 : i32
    return %arg0, %c0_i32, %arg1 : i32, i32, i32
  }
  func.func @transform_1(%arg0: i32, %arg1: i32) -> (i32, i32, i32) {
    %c0_i32 = arith.constant 0 : i32
    %c0_i32_0 = arith.constant 0 : i32
    return %arg0, %c0_i32, %arg1 : i32, i32, i32
  }
  func.func @transform_2(%arg0: i32, %arg1: i32) -> (i32, i32, i32) {
    %c0_i32 = arith.constant 0 : i32
    %c0_i32_0 = arith.constant 0 : i32
    %c0_i32_1 = arith.constant 0 : i32
    return %arg0, %c0_i32, %c0_i32_0 : i32, i32, i32
  }
}

</mosaic_0001>

<llo_original>
// kernel: tpu_custom_call.1
$region0: #{tpu_custom_call.1}
  #allocation0 [shape = 'u32[]', space=smem, size = 0x4, offset = 0x4, fixed_abs, tag = 'smem constant byte address 0x4 - core index']
  #allocation1 [shape = 'u32[144,128]{1,0:T(1,128)}', space=vmem, size = 0x12000, scoped, tag = 'internal scratch']
  #allocation2 [shape = 'f32[1,1]{1,0:T(1,128)}', space=vmem, size = 0x200, scoped, tag = 'scratch operand']
  %s0 = inlined_call_operand.hbm [shape: f32[8,4,256], index: 0, kind: input, shape index: {}]
  %s1 = inlined_call_operand.hbm [shape: s32[8,1,256], index: 1, kind: input, shape index: {}]
  %s2 = inlined_call_operand.vmem [shape: f32[8,1,1], index: 2, kind: output, shape index: {}]
  %s3 = sld [smem:[#allocation0]]
  $region57: #{tpu_custom_call.1} parent=0
    _
  %s5 = ssub.s32 1, %s3
  %s6 = scalar_select 0, %s5, %s3
  $region1: #{tpu_custom_call.1} parent=0
    #allocation3 [shape = 'u8[8192]{0}', space=vmem, size = 0x2000, scoped, tag = 'input window, operand 0']
    #allocation4 [shape = 's32[2]{0}', space=sflag, size = 0x8, scoped, tag = 'scoped memory for tpu_custom_call.1']
    #allocation5 [shape = 'u8[2048]{0}', space=vmem, size = 0x800, scoped, tag = 'input window, operand 1']
    #allocation6 [shape = 's32[2]{0}', space=sflag, size = 0x8, scoped, tag = 'scoped memory for tpu_custom_call.1']
    %7 = vsyncpa [#allocation4], 0
    %s8 = scalar_lea.sflag [#allocation4], 1
    %9 = vsyncpa %s8, 0
    %10 = vsyncpa [#allocation6], 0
    %s11 = scalar_lea.sflag [#allocation6], 1
    %12 = vsyncpa %s11, 0
    loop: start=0, step=1, limit=10
    $region2: #{tpu_custom_call.1} parent=1 // loop_pre_header
      _
    $region3: #{tpu_custom_call.1} parent=1 // loop_header
      %s14 = sphi 0, %s18
      %p15 = scmp.ge.s32.totalorder %s14, 10
      %s21 = sphi 0, %s33
      %s22 = sphi 0, %s29
      %s23 = sphi 0, %s21
      %s24 = sphi 0, %s22
      %s25 = sphi 0, %s23
      %s26 = sphi 0, %s24
      %s38 = sphi 0, %s40
      %s41 = sphi 0, %s38
      %s42 = sphi 0, %s41
      %s58 = sphi 0, %s42
      %s66 = sphi 0, %s68
      %s69 = sphi 0, %s66
      %s70 = sphi 0, %s69
      %s86 = sphi 0, %s70
      %s92 = sphi 0, %s94
      %s95 = sphi 0, %s92
      %s96 = sphi 0, %s95
      %s112 = sphi 0, %s96
    $region4: #{tpu_custom_call.1} parent=1 // loop_header_branch
      %17 = sbr.rel (%p15) target = $region8
    $region5: #{tpu_custom_call.1} parent=1 // loop_body
      %s19 = ssub.s32 %s14, 1
      %s20 = ssub.s32 %s14, 2
      %s27 = sadd.s32 1, %s22
      %p28 = scmp.ge.s32.totalorder %s27, 1
      %s29 = scalar_select %p28, 0, %s27
      %s30 = sadd.s32 1, %s21
      %s31 = scalar_select %p28, %s30, %s21
      %p32 = scmp.ge.s32.totalorder %s31, 8
      %s33 = scalar_select %p32, 0, %s31
      %s34 = ssub.s32 %s21, %s33
      %s35 = ssub.s32 %s22, %s29
      %s36 = sor.u32 %s34, %s35
      %p37 = scmp.eq.s32.totalorder %s36, 0
      %s39 = sadd.s32 %s38, 1
      %s40 = scalar_select %p37, %s38, %s39
      %p43 = pneg %p37
      %p44 = scmp.eq.s32.totalorder %s14, 7
      %p45 = por %p43, %p44
      %p46 = scmp.ne.s32.totalorder %s38, %s41
      %p47 = scmp.eq.s32.totalorder %s14, 0
      %p48 = por %p46, %p47
      %p49 = scmp.ne.s32.totalorder %s38, %s41
      %p50 = scmp.eq.s32.totalorder %s19, 7
      %p51 = por %p49, %p50
      %p52 = scmp.ne.s32.totalorder %s41, %s42
      %p53 = scmp.eq.s32.totalorder %s19, 0
      %p54 = por %p52, %p53
      %p55 = scmp.ne.s32.totalorder %s41, %s42
      %p56 = scmp.eq.s32.totalorder %s20, 7
      %p57 = por %p55, %p56
      %p59 = scmp.ne.s32.totalorder %s42, %s58
      %p60 = scmp.eq.s32.totalorder %s20, 0
      %p61 = por %p59, %p60
      %s62 = ssub.s32 %s21, %s33
      %s63 = ssub.s32 %s22, %s29
      %s64 = sor.u32 %s62, %s63
      %p65 = scmp.eq.s32.totalorder %s64, 0
      %s67 = sadd.s32 %s66, 1
      %s68 = scalar_select %p65, %s66, %s67
      %p71 = pneg %p65
      %p72 = scmp.eq.s32.totalorder %s14, 7
      %p73 = por %p71, %p72
      %p74 = scmp.ne.s32.totalorder %s66, %s69
      %p75 = scmp.eq.s32.totalorder %s14, 0
      %p76 = por %p74, %p75
      %p77 = scmp.ne.s32.totalorder %s66, %s69
      %p78 = scmp.eq.s32.totalorder %s19, 7
      %p79 = por %p77, %p78
      %p80 = scmp.ne.s32.totalorder %s69, %s70
      %p81 = scmp.eq.s32.totalorder %s19, 0
      %p82 = por %p80, %p81
      %p83 = scmp.ne.s32.totalorder %s69, %s70
      %p84 = scmp.eq.s32.totalorder %s20, 7
      %p85 = por %p83, %p84
      %p87 = scmp.ne.s32.totalorder %s70, %s86
      %p88 = scmp.eq.s32.totalorder %s20, 0
      %p89 = por %p87, %p88
      %s90 = ssub.s32 %s21, %s33
      %p91 = scmp.eq.s32.totalorder %s90, 0
      %s93 = sadd.s32 %s92, 1
      %s94 = scalar_select %p91, %s92, %s93
      %p97 = pneg %p91
      %p98 = scmp.eq.s32.totalorder %s14, 7
      %p99 = por %p97, %p98
      %p100 = scmp.ne.s32.totalorder %s92, %s95
      %p101 = scmp.eq.s32.totalorder %s14, 0
      %p102 = por %p100, %p101
      %p103 = scmp.ne.s32.totalorder %s92, %s95
      %p104 = scmp.eq.s32.totalorder %s19, 7
      %p105 = por %p103, %p104
      %p106 = scmp.ne.s32.totalorder %s95, %s96
      %p107 = scmp.eq.s32.totalorder %s19, 0
      %p108 = por %p106, %p107
      %p109 = scmp.ne.s32.totalorder %s95, %s96
      %p110 = scmp.eq.s32.totalorder %s20, 7
      %p111 = por %p109, %p110
      %p113 = scmp.ne.s32.totalorder %s96, %s112
      %p114 = scmp.eq.s32.totalorder %s20, 0
      %p115 = por %p113, %p114
      %p116 = scmp.le.s32.totalorder 1, %s14
      %p117 = scmp.lt.s32.totalorder %s14, 9
      %p118 = pnand %p116, %p117
      %p119 = pneg %p118
      // Predicated region
      $region9: #{tpu_custom_call.1} parent=5 // pred_check
        _
      $region10: #{tpu_custom_call.1} parent=5 // pred_check_branch
        %121 = sbr.rel (%p118) target = $region12
      $region11: #{tpu_custom_call.1} parent=5 // pred_region
        %s122 = ssub.s32 %s14, 1
      $region12: #{tpu_custom_call.1} parent=5 // pred_fallthru
        _
      %p123 = scmp.lt.s32.totalorder %s14, 8
      // Predicated region
      $region13: #{tpu_custom_call.1} parent=5 // pred_check
        %p124 = pneg %p123
      $region14: #{tpu_custom_call.1} parent=5 // pred_check_branch
        %126 = sbr.rel (%p124) target = $region16
      $region15: #{tpu_custom_call.1} parent=5 // pred_region
        // Predicated region
        $region17: #{tpu_custom_call.1} parent=15 // pred_check
          %p127 = pneg %p48
        $region18: #{tpu_custom_call.1} parent=15 // pred_check_branch
          %129 = sbr.rel (%p127) target = $region20
        $region19: #{tpu_custom_call.1} parent=15 // pred_region
          %s130 = sand.u32 %s38, 1
          %s131 = scalar_lea.sflag [#allocation4], %s130
          %s132 = sand.u32 %s38, 1
          %s133 = smul.addr %s132, 8
          %s134 = scalar_lea.vmem [#allocation3], %s133
          %s135 = smul.u32 2, %s22
          %s137 = ssub.s32 128, 128
          %138 = vsyncadd %s131, %s137
          %s139 = smul.addr %s21, 2
          %s140 = sadd.s32 %s135, %s139
          %s141 = smul.addr %s140, 64
          %s142 = scalar_lea.hbm %s0, %s141
          %s144 = sshll.u32 %s134, 4
          %s145 = int_to_ptr.vmem [resolvable:$true] %s144
          %147 = dma.hbm_to_vmem [thread:$0]  %s142, 128, %s145, %s131
        $region20: #{tpu_custom_call.1} parent=15 // pred_fallthru
          _
        // Predicated region
        $region21: #{tpu_custom_call.1} parent=15 // pred_check
          %p148 = pneg %p76
        $region22: #{tpu_custom_call.1} parent=15 // pred_check_branch
          %150 = sbr.rel (%p148) target = $region24
        $region23: #{tpu_custom_call.1} parent=15 // pred_region
          %s151 = sand.u32 %s66, 1
          %s152 = scalar_lea.sflag [#allocation6], %s151
          %s153 = sand.u32 %s66, 1
          %s154 = smul.addr %s153, 2
          %s155 = scalar_lea.vmem [#allocation5], %s154
          %s156 = smul.u32 2, %s22
          %s158 = ssub.s32 32, 32
          %159 = vsyncadd %s152, %s158
          %s160 = smul.addr %s21, 2
          %s161 = sadd.s32 %s156, %s160
          %s162 = smul.addr %s161, 16
          %s163 = scalar_lea.hbm %s1, %s162
          %s165 = sshll.u32 %s155, 4
          %s166 = int_to_ptr.vmem [resolvable:$true] %s165
          %168 = dma.hbm_to_vmem [thread:$0]  %s163, 32, %s166, %s152
        $region24: #{tpu_custom_call.1} parent=15 // pred_fallthru
          _
      $region16: #{tpu_custom_call.1} parent=5 // pred_fallthru
        _
      %p169 = scmp.le.s32.totalorder 1, %s14
      %p170 = scmp.lt.s32.totalorder %s14, 9
      %p171 = pnand %p169, %p170
      %p172 = pneg %p171
      // Predicated region
      $region25: #{tpu_custom_call.1} parent=5 // pred_check
        _
      $region26: #{tpu_custom_call.1} parent=5 // pred_check_branch
        %174 = sbr.rel (%p171) target = $region28
      $region27: #{tpu_custom_call.1} parent=5 // pred_region
        %s175 = ssub.s32 %s14, 1
        %s176 = sand.u32 %s41, 1
        %s177 = scalar_lea.sflag [#allocation4], %s176
        %s178 = sand.u32 %s41, 1
        %s179 = smul.addr %s178, 8
        %s180 = scalar_lea.vmem [#allocation3], %s179
        // Predicated region
        $region29: #{tpu_custom_call.1} parent=27 // pred_check
          %p181 = pneg %p54
        $region30: #{tpu_custom_call.1} parent=27 // pred_check_branch
          %183 = sbr.rel (%p181) target = $region32
        $region31: #{tpu_custom_call.1} parent=27 // pred_region
          %184 = dma.done %s177, 128
        $region32: #{tpu_custom_call.1} parent=27 // pred_fallthru
          _
        %s185 = sand.u32 %s69, 1
        %s186 = scalar_lea.sflag [#allocation6], %s185
        %s187 = sand.u32 %s69, 1
        %s188 = smul.addr %s187, 2
        %s189 = scalar_lea.vmem [#allocation5], %s188
        // Predicated region
        $region33: #{tpu_custom_call.1} parent=27 // pred_check
          %p190 = pneg %p82
        $region34: #{tpu_custom_call.1} parent=27 // pred_check_branch
          %192 = sbr.rel (%p190) target = $region36
        $region35: #{tpu_custom_call.1} parent=27 // pred_region
          %193 = dma.done %s186, 32
        $region36: #{tpu_custom_call.1} parent=27 // pred_fallthru
          _
        %s194 = sand.u32 %s41, 1
        %s195 = scalar_lea.sflag [#allocation4], %s194
        %s196 = sand.u32 %s41, 1
        %s197 = smul.addr %s196, 8
        %s198 = scalar_lea.vmem [#allocation3], %s197
        %p199 = pneg %p54
        %p200 = pneg %p51
        %s201 = sand.u32 %s69, 1
        %s202 = scalar_lea.sflag [#allocation6], %s201
        %s203 = sand.u32 %s69, 1
        %s204 = smul.addr %s203, 2
        %s205 = scalar_lea.vmem [#allocation5], %s204
        %p206 = pneg %p82
        %p207 = pneg %p79
        %p208 = pneg %p108
        %p209 = pneg %p105
        %p210 = scmp.lt.s32.totalorder %s23, 7
        %s211 = scalar_select %p210, %s23, 7
        %s212 = scalar_lea.vmem %s2, %s211
        %s213 = smul.u32 2, %s24
        %s214 = smul.u32 2, %s24
        %p215 = scmp.lt.s32.totalorder %s23, 7
        %s216 = scalar_select %p215, %s23, 7
        %s217 = scalar_lea.vmem %s2, %s216
        %p218 = scmp.eq.s32.totalorder %s24, 0
        // Predicated region
        $region37: #{tpu_custom_call.1} parent=27 // pred_check
          %p219 = pneg %p218
        $region38: #{tpu_custom_call.1} parent=27 // pred_check_branch
          %221 = sbr.rel (%p219) target = $region40
        $region39: #{tpu_custom_call.1} parent=27 // pred_region
          %vm222 = vcmask 0
          %223 = vst.msk [vmem:[#allocation2] sm:$0x1] %vm222, 0.0
        $region40: #{tpu_custom_call.1} parent=27 // pred_fallthru
          _
        %v224 = vld [vmem:[%s180] sm:$0xff]
        %v225 = vld [vmem:[%s189] sm:$0x3]
        %v226 = vlaneseq
        %v227 = vand.u32 %v226, 127
        %v228 = vadd.s32 %v227, 128
        %s229 = smul.u32 %s24, 256
        %v230 = vstv %s229
        %v231 = vadd.s32 %v227, %v230
        %v232 = vadd.s32 %v228, %v230
        %vm233 = vcmp.lt.s32.totalorder %v231, 256
        %vm234 = vcmp.lt.s32.totalorder %v232, 256
        %v236 = vcombine.high %v224, %v224
        %vm238 = vcmask 1043456
        %v239 = vsel %vm238, %v224, -inf
        %v240 = vrot.slane %v239, 4
        %v241 = vmax.f32 %v239, %v240
        %v242 = vrot.slane %v241, 2
        %v243 = vmax.f32 %v241, %v242
        %v244 = vrot.slane %v243, 1
        %v245 = vmax.f32 %v243, %v244
        %v246 = vsel %vm238, %v236, -inf
        %v247 = vrot.slane %v246, 4
        %v248 = vmax.f32 %v246, %v247
        %v249 = vrot.slane %v248, 2
        %v250 = vmax.f32 %v248, %v249
        %v251 = vrot.slane %v250, 1
        %v252 = vmax.f32 %v250, %v251
        %v255 = vcombine.low %v245, %v252
        %v257 = vsub.f32 %v224, %v255
        %v258 = vmul.f32 %v257, 1.442695
        %v259 = vpow.pop %v258
        %v260 = vlaneseq
        %v261 = vshrl.u32 %v260, 7
        %v262 = vlaneseq
        %v263 = vshrl.u32 %v262, 7
        %v264 = vsub.s32 0, %v263
        %v265 = vrot.slane %v225, %v264
        %v266 = vlaneseq
        %v267 = vshrl.u32 %v266, 7
        %v268 = vsub.s32 1, %v267
        %v269 = vrot.slane %v225, %v268
        %vm270 = vcmp.eq.s32.totalorder %v261, %v265
        %vm271 = vcmp.eq.s32.totalorder %v261, %v269
        %v272 = vsel %vm270, %v224, 0.0
        %v273 = vsel %vm271, %v236, 0.0
        %v274 = vsel %vm238, %v272, 0.0
        %v275 = vrot.slane %v274, 4
        %v276 = vadd.f32 %v274, %v275
        %v277 = vrot.slane %v276, 2
        %v278 = vadd.f32 %v276, %v277
        %v279 = vrot.slane %v278, 1
        %v280 = vadd.f32 %v278, %v279
        %v281 = vsel %vm238, %v273, 0.0
        %v282 = vrot.slane %v281, 4
        %v283 = vadd.f32 %v281, %v282
        %v284 = vrot.slane %v283, 2
        %v285 = vadd.f32 %v283, %v284
        %v286 = vrot.slane %v285, 1
        %v287 = vadd.f32 %v285, %v286
        %v289 = vcombine.high %v259, %v259
        %v291 = vsel %vm238, %v259, 0.0
        %v292 = vrot.slane %v291, 4
        %v293 = vadd.f32 %v291, %v292
        %v294 = vrot.slane %v293, 2
        %v295 = vadd.f32 %v293, %v294
        %v296 = vrot.slane %v295, 1
        %v297 = vadd.f32 %v295, %v296
        %v298 = vsel %vm238, %v289, 0.0
        %v299 = vrot.slane %v298, 4
        %v300 = vadd.f32 %v298, %v299
        %v301 = vrot.slane %v300, 2
        %v302 = vadd.f32 %v300, %v301
        %v303 = vrot.slane %v302, 1
        %v304 = vadd.f32 %v302, %v303
        %v305 = vlog2.pop %v297
        %v306 = vmul.f32 %v305, 0.6931472
        %v307 = vlog2.pop %v304
        %v308 = vmul.f32 %v307, 0.6931472
        %v309 = vadd.f32 %v245, %v306
        %v310 = vadd.f32 %v252, %v308
        %v311 = vsub.f32 %v309, %v280
        %v312 = vsub.f32 %v310, %v287
        %v313 = vsel %vm233, %v311, 0.0
        %v314 = vsel %vm234, %v312, 0.0
        %v315 = vld [vmem:[#allocation2] sm:$0x1]
        %v316 = vadd.f32 %v313, %v314
        %317 = vadd.xlane.f32.xlu0 %v316
        %v318 = vpop.xlane.xlu0 %317
        %v319 = vadd.f32 %v315, %v318
        %vm320 = vcmask 0
        %321 = vst.msk [vmem:[#allocation2] sm:$0x1] %vm320, %v319
        // Predicated region
        $region41: #{tpu_custom_call.1} parent=27 // pred_check
          %p322 = pneg %p218
        $region42: #{tpu_custom_call.1} parent=27 // pred_check_branch
          %324 = sbr.rel (%p322) target = $region44
        $region43: #{tpu_custom_call.1} parent=27 // pred_region
          %v325 = vld [vmem:[#allocation2] sm:$0x1]
          %v326 = vrcp.pop 256.0
          %v327 = vmul.f32 %v325, %v326
          %328 = vst.msk [vmem:[%s217] sm:$0x1] %vm320, %v327
        $region44: #{tpu_custom_call.1} parent=27 // pred_fallthru
          _
        %p329 = scmp.lt.s32.totalorder %s23, 7
        %s330 = scalar_select %p329, %s23, 7
        %s331 = scalar_lea.vmem %s2, %s330
        // Predicated region
        $region45: #{tpu_custom_call.1} parent=27 // pred_check
          %p332 = pneg %p105
        $region46: #{tpu_custom_call.1} parent=27 // pred_check_branch
          %334 = sbr.rel (%p332) target = $region48
        $region47: #{tpu_custom_call.1} parent=27 // pred_region
          _
        $region48: #{tpu_custom_call.1} parent=27 // pred_fallthru
          _
      $region28: #{tpu_custom_call.1} parent=5 // pred_fallthru
        _
      %p335 = scmp.le.s32.totalorder 2, %s14
      // Predicated region
      $region49: #{tpu_custom_call.1} parent=5 // pred_check
        %p336 = pneg %p335
      $region50: #{tpu_custom_call.1} parent=5 // pred_check_branch
        %338 = sbr.rel (%p336) target = $region52
      $region51: #{tpu_custom_call.1} parent=5 // pred_region
        %s339 = ssub.s32 %s14, 2
        // Predicated region
        $region53: #{tpu_custom_call.1} parent=51 // pred_check
          %p340 = pneg %p111
        $region54: #{tpu_custom_call.1} parent=51 // pred_check_branch
          %342 = sbr.rel (%p340) target = $region56
        $region55: #{tpu_custom_call.1} parent=51 // pred_region
          %p343 = scmp.lt.s32.totalorder %s25, 7
          %s344 = scalar_select %p343, %s25, 7
          %s345 = scalar_lea.vmem %s2, %s344
        $region56: #{tpu_custom_call.1} parent=51 // pred_fallthru
          _
      $region52: #{tpu_custom_call.1} parent=5 // pred_fallthru
        _
    $region6: #{tpu_custom_call.1} parent=1 // loop_footer
      %s18 = sadd.s32 1, %s14
    $region7: #{tpu_custom_call.1} parent=1 // loop_footer_branch
      %13 = sbr.rel target = $region3
    $region8: #{tpu_custom_call.1} parent=1 // loop_exit
      _
    %346 = vsyncpa [#allocation4], 1
    %s347 = scalar_lea.sflag [#allocation4], 1
    %348 = vsyncpa %s347, 1
    %349 = vsyncpa [#allocation6], 1
    %s350 = scalar_lea.sflag [#allocation6], 1
    %351 = vsyncpa %s350, 1

</llo_original>
